<compile_context>
chip_gen: v6e
topology: v6e:2x2x1
jax: 0.10.0
libtpu: 0.0.40
codegen_flags: <defaults>
</compile_context>

<pallas_src>
import jax
import jax.numpy as jnp
from jax.experimental import pallas as pl
from jax.experimental.pallas import tpu as pltpu

LANE = 128


def _round_up(n, m):
    return ((n + m - 1) // m) * m


def _mlp_kernel(x_ref, w1_ref, b1_ref, w2_ref, b2_ref, w3_ref, b3_ref, o_ref):
    # Layer 1: Linear(34 -> 100) + ReLU.  bf16 x bf16 on the MXU, f32 accumulate.
    h1 = jnp.dot(x_ref[...], w1_ref[...], preferred_element_type=jnp.float32)
    h1 = jnp.maximum(h1 + b1_ref[...], 0.0)
    # Layer 2: Linear(100 -> 100) + ReLU (f32).
    h2 = jnp.dot(h1, w2_ref[...], preferred_element_type=jnp.float32)
    h2 = jnp.maximum(h2 + b2_ref[...], 0.0)
    # Layer 3: Linear(100 -> 128) (zero-padded from 2), no activation.
    out = jnp.dot(h2, w3_ref[...], preferred_element_type=jnp.float32)
    o_ref[...] = (out + b3_ref[...]).astype(o_ref.dtype)


def drop_model_forward(x, w1, b1, w2, b2, w3, b3, *, block_b=512):
    """Fused 3-layer MLP forward. x: (B, 34) f32 -> (B, 2) f32."""
    B, in_dim = x.shape
    out_dim = w3.shape[1]

    # bf16 for the streaming input + matching first-layer weight.
    x_bf = x.astype(jnp.bfloat16)
    w1_bf = w1.astype(jnp.bfloat16)

    # Lane-dense final layer: pad 2 -> 128 output columns with zeros.
    n_pad = _round_up(out_dim, LANE)
    w3_p = jnp.pad(w3.astype(jnp.float32), ((0, 0), (0, n_pad - out_dim)))
    b3_p = jnp.pad(b3.astype(jnp.float32), ((0, 0), (0, n_pad - out_dim)))

    # Batch tiling: tiles are a multiple of 8 rows; pad the ragged tail with zeros.
    # block_b=512 keeps (2x x-tile + 2x out-tile + h1/h2 temporaries + ~60 KB weights)
    # far under even v5e's 16 MiB default scoped VMEM (and v7x's 64 MiB physical).
    tb = min(block_b, _round_up(B, 8))
    b_pad = _round_up(B, tb)
    if b_pad != B:
        x_bf = jnp.pad(x_bf, ((0, b_pad - B), (0, 0)))

    pinned = lambda shape: pl.BlockSpec(shape, lambda i: (0, 0))  # resident in VMEM

    out = pl.pallas_call(
        _mlp_kernel,
        out_shape=jax.ShapeDtypeStruct((b_pad, n_pad), jnp.float32),
        grid_spec=pltpu.PrefetchScalarGridSpec(
            num_scalar_prefetch=0,
            grid=(b_pad // tb,),
            in_specs=[
                pl.BlockSpec((tb, in_dim), lambda i: (i, 0)),   # x: batch-tiled
                pinned(w1_bf.shape), pinned(b1.shape),
                pinned(w2.shape), pinned(b2.shape),
                pinned(w3_p.shape), pinned(b3_p.shape),
            ],
            out_specs=pl.BlockSpec((tb, n_pad), lambda i: (i, 0)),
        ),
        compiler_params=pltpu.CompilerParams(
            dimension_semantics=("parallel",),  # megacore-shard batch tiles on v7x
        ),
    )(x_bf, w1_bf,
      b1.astype(jnp.float32),
      w2.astype(jnp.float32), b2.astype(jnp.float32),
      w3_p, b3_p)

    return out[:B, :out_dim]


def init_params(key):
    """Deterministic synthetic init matching DropModel.__init__ shapes.

    PyTorch shapes: layer1.weight (100,34), layer2.weight (100,100),
    layer3.weight (2,100), biases (100,), (100,), (2,).
    Stored here transposed as (in, out) for the x @ W convention.
    (Values for layers 2/3 are not kaiming-uniform; only shapes match.)
    """
    k1, k2, k3, kb1, kb2, kb3 = jax.random.split(key, 6)
    w1 = jax.random.uniform(k1, (34, 100), jnp.float32)                 # U[0,1) like nn.init.uniform_
    w2 = jax.random.uniform(k2, (100, 100), jnp.float32, minval=-0.1, maxval=0.1)
    w3 = jax.random.uniform(k3, (100, 2), jnp.float32, minval=-0.1, maxval=0.1)
    b1 = jax.random.uniform(kb1, (1, 100), jnp.float32, minval=-0.1, maxval=0.1)
    b2 = jax.random.uniform(kb2, (1, 100), jnp.float32, minval=-0.1, maxval=0.1)
    b3 = jax.random.uniform(kb3, (1, 2), jnp.float32, minval=-0.1, maxval=0.1)
    return w1, b1, w2, b2, w3, b3


def reference_forward(x, w1, b1, w2, b2, w3, b3):
    # Mirror the kernel's bf16 rounding of x/w1 so the comparison isolates
    # MXU-vs-XLA accumulation differences only.
    xf = x.astype(jnp.bfloat16).astype(jnp.float32)
    w1f = w1.astype(jnp.bfloat16).astype(jnp.float32)
    h1 = jnp.maximum(xf @ w1f + b1, 0.0)
    h2 = jnp.maximum(h1 @ w2 + b2, 0.0)
    return h2 @ w3 + b3


if __name__ == "__main__":
    key = jax.random.PRNGKey(0)
    kx, kp = jax.random.split(key)
    batch = 8
    x = jax.random.normal(kx, (batch, 34), jnp.float32)
    params = init_params(kp)

    out = drop_model_forward(x, *params)
    out = jax.block_until_ready(out)

    ref = reference_forward(x, *params)
    assert out.shape == (batch, 2), out.shape
    assert jnp.allclose(out, ref, atol=2e-3, rtol=2e-3), "mismatch vs reference"

    print("KERNEL_OK")
</pallas_src>

<mosaic_0001>
module attributes {stable_mosaic.version = 11 : i64} {
  func.func @_mlp_kernel(%arg0: i32, %arg1: memref<8x34xbf16, #tpu.memory_space<vmem>>, %arg2: memref<34x100xbf16, #tpu.memory_space<vmem>>, %arg3: memref<1x100xf32, #tpu.memory_space<vmem>>, %arg4: memref<100x100xf32, #tpu.memory_space<vmem>>, %arg5: memref<1x100xf32, #tpu.memory_space<vmem>>, %arg6: memref<100x128xf32, #tpu.memory_space<vmem>>, %arg7: memref<1x128xf32, #tpu.memory_space<vmem>>, %arg8: memref<8x128xf32, #tpu.memory_space<vmem>>) attributes {dimension_semantics = [#tpu.dimension_semantics<parallel>], iteration_bounds = array<i64: 1>, scalar_prefetch = 0 : i64, scratch_operands = 0 : i64, tpu.core_type = #tpu.core_type<tc>, window_params = [{transform_indices = @transform_0, window_bounds = array<i64: 8, 34>}, {pipeline_mode = #tpu.pipeline_mode<synchronous>, transform_indices = @transform_1, window_bounds = array<i64: 34, 100>}, {pipeline_mode = #tpu.pipeline_mode<synchronous>, transform_indices = @transform_2, window_bounds = array<i64: 1, 100>}, {pipeline_mode = #tpu.pipeline_mode<synchronous>, transform_indices = @transform_3, window_bounds = array<i64: 100, 100>}, {pipeline_mode = #tpu.pipeline_mode<synchronous>, transform_indices = @transform_4, window_bounds = array<i64: 1, 100>}, {pipeline_mode = #tpu.pipeline_mode<synchronous>, transform_indices = @transform_5, window_bounds = array<i64: 100, 128>}, {pipeline_mode = #tpu.pipeline_mode<synchronous>, transform_indices = @transform_6, window_bounds = array<i64: 1, 128>}, {transform_indices = @transform_7, window_bounds = array<i64: 8, 128>}]} {
    %c0 = arith.constant 0 : index
    %c0_0 = arith.constant 0 : index
    %0 = vector.load %arg1[%c0, %c0_0] : memref<8x34xbf16, #tpu.memory_space<vmem>>, vector<8x34xbf16>
    %c0_1 = arith.constant 0 : index
    %c0_2 = arith.constant 0 : index
    %1 = vector.load %arg2[%c0_1, %c0_2] : memref<34x100xbf16, #tpu.memory_space<vmem>>, vector<34x100xbf16>
    %cst = arith.constant dense<0.000000e+00> : vector<8x100xf32>
    %2 = tpu.matmul %0, %1, %cst {dimension_numbers = #tpu.dot_dimension_numbers<[1], [0], [0], [1], [0, 0, 1, 1], [], []>} : vector<8x34xbf16>, vector<34x100xbf16>, vector<8x100xf32> -> vector<8x100xf32>
    %c0_3 = arith.constant 0 : index
    %c0_4 = arith.constant 0 : index
    %3 = vector.load %arg3[%c0_3, %c0_4] : memref<1x100xf32, #tpu.memory_space<vmem>>, vector<1x100xf32>
    %4 = vector.broadcast %3 : vector<1x100xf32> to vector<8x100xf32>
    %5 = arith.addf %2, %4 : vector<8x100xf32>
    %cst_5 = arith.constant 0.000000e+00 : f32
    %6 = vector.broadcast %cst_5 : f32 to vector<8x100xf32>
    %7 = arith.maximumf %5, %6 : vector<8x100xf32>
    %c0_6 = arith.constant 0 : index
    %c0_7 = arith.constant 0 : index
    %8 = vector.load %arg4[%c0_6, %c0_7] : memref<100x100xf32, #tpu.memory_space<vmem>>, vector<100x100xf32>
    %cst_8 = arith.constant dense<0.000000e+00> : vector<8x100xf32>
    %9 = tpu.matmul %7, %8, %cst_8 {dimension_numbers = #tpu.dot_dimension_numbers<[1], [0], [0], [1], [0, 0, 1, 1], [], []>} : vector<8x100xf32>, vector<100x100xf32>, vector<8x100xf32> -> vector<8x100xf32>
    %c0_9 = arith.constant 0 : index
    %c0_10 = arith.constant 0 : index
    %10 = vector.load %arg5[%c0_9, %c0_10] : memref<1x100xf32, #tpu.memory_space<vmem>>, vector<1x100xf32>
    %11 = vector.broadcast %10 : vector<1x100xf32> to vector<8x100xf32>
    %12 = arith.addf %9, %11 : vector<8x100xf32>
    %cst_11 = arith.constant 0.000000e+00 : f32
    %13 = vector.broadcast %cst_11 : f32 to vector<8x100xf32>
    %14 = arith.maximumf %12, %13 : vector<8x100xf32>
    %c0_12 = arith.constant 0 : index
    %c0_13 = arith.constant 0 : index
    %15 = vector.load %arg6[%c0_12, %c0_13] : memref<100x128xf32, #tpu.memory_space<vmem>>, vector<100x128xf32>
    %cst_14 = arith.constant dense<0.000000e+00> : vector<8x128xf32>
    %16 = tpu.matmul %14, %15, %cst_14 {dimension_numbers = #tpu.dot_dimension_numbers<[1], [0], [0], [1], [0, 0, 1, 1], [], []>} : vector<8x100xf32>, vector<100x128xf32>, vector<8x128xf32> -> vector<8x128xf32>
    %c0_15 = arith.constant 0 : index
    %c0_16 = arith.constant 0 : index
    %17 = vector.load %arg7[%c0_15, %c0_16] : memref<1x128xf32, #tpu.memory_space<vmem>>, vector<1x128xf32>
    %18 = vector.broadcast %17 : vector<1x128xf32> to vector<8x128xf32>
    %19 = arith.addf %16, %18 : vector<8x128xf32>
    %c0_17 = arith.constant 0 : index
    %c0_18 = arith.constant 0 : index
    %20 = vector.load %arg8[%c0_17, %c0_18] : memref<8x128xf32, #tpu.memory_space<vmem>>, vector<8x128xf32>
    tpu.vector_store %arg8[%c0_17, %c0_18], %19 {strides = array<i32>} : memref<8x128xf32, #tpu.memory_space<vmem>>, vector<8x128xf32>,
    return
  }
  func.func @transform_0(%arg0: i32) -> (i32, i32) {
    %c0_i32 = arith.constant 0 : i32
    %c0_i32_0 = arith.constant 0 : i32
    return %arg0, %c0_i32 : i32, i32
  }
  func.func @transform_1(%arg0: i32) -> (i32, i32) {
    %c0_i32 = arith.constant 0 : i32
    %c0_i32_0 = arith.constant 0 : i32
    %c0_i32_1 = arith.constant 0 : i32
    return %c0_i32, %c0_i32_0 : i32, i32
  }
  func.func @transform_2(%arg0: i32) -> (i32, i32) {
    %c0_i32 = arith.constant 0 : i32
    %c0_i32_0 = arith.constant 0 : i32
    %c0_i32_1 = arith.constant 0 : i32
    return %c0_i32, %c0_i32_0 : i32, i32
  }
  func.func @transform_3(%arg0: i32) -> (i32, i32) {
    %c0_i32 = arith.constant 0 : i32
    %c0_i32_0 = arith.constant 0 : i32
    %c0_i32_1 = arith.constant 0 : i32
    return %c0_i32, %c0_i32_0 : i32, i32
  }
  func.func @transform_4(%arg0: i32) -> (i32, i32) {
    %c0_i32 = arith.constant 0 : i32
    %c0_i32_0 = arith.constant 0 : i32
    %c0_i32_1 = arith.constant 0 : i32
    return %c0_i32, %c0_i32_0 : i32, i32
  }
  func.func @transform_5(%arg0: i32) -> (i32, i32) {
    %c0_i32 = arith.constant 0 : i32
    %c0_i32_0 = arith.constant 0 : i32
    %c0_i32_1 = arith.constant 0 : i32
    return %c0_i32, %c0_i32_0 : i32, i32
  }
  func.func @transform_6(%arg0: i32) -> (i32, i32) {
    %c0_i32 = arith.constant 0 : i32
    %c0_i32_0 = arith.constant 0 : i32
    %c0_i32_1 = arith.constant 0 : i32
    return %c0_i32, %c0_i32_0 : i32, i32
  }
  func.func @transform_7(%arg0: i32) -> (i32, i32) {
    %c0_i32 = arith.constant 0 : i32
    %c0_i32_0 = arith.constant 0 : i32
    return %arg0, %c0_i32 : i32, i32
  }
}

</mosaic_0001>

<llo_original>
// kernel: tpu_custom_call.1
$region0: #{tpu_custom_call.1}
  #allocation0 [shape = 'u32[]', space=smem, size = 0x4, offset = 0x4, fixed_abs, tag = 'smem constant byte address 0x4 - core index']
  #allocation1 [shape = 'u32[144,128]{1,0:T(1,128)}', space=vmem, size = 0x12000, scoped, tag = 'internal scratch']
  %s0 = inlined_call_operand.hbm [shape: bf16[8,34], index: 0, kind: input, shape index: {}]
  %s1 = inlined_call_operand.hbm [shape: bf16[34,100], index: 1, kind: input, shape index: {}]
  %s2 = inlined_call_operand.vmem [shape: f32[1,100], index: 2, kind: input, shape index: {}]
  %s3 = inlined_call_operand.hbm [shape: f32[100,100], index: 3, kind: input, shape index: {}]
  %s4 = inlined_call_operand.vmem [shape: f32[1,100], index: 4, kind: input, shape index: {}]
  %s5 = inlined_call_operand.hbm [shape: f32[100,128], index: 5, kind: input, shape index: {}]
  %s6 = inlined_call_operand.vmem [shape: f32[1,128], index: 6, kind: input, shape index: {}]
  %s7 = inlined_call_operand.hbm [shape: f32[8,128], index: 7, kind: output, shape index: {}]
  %s8 = sld [smem:[#allocation0]]
  $region54: #{tpu_custom_call.1} parent=0
    _
  %s10 = ssub.s32 1, %s8
  %s11 = scalar_select 0, %s10, %s8
  $region1: #{tpu_custom_call.1} parent=0
    #allocation2 [shape = 'u8[2048]{0}', space=vmem, size = 0x800, scoped, tag = 'input window, operand 0, single buffered']
    #allocation3 [shape = 's32[1]{0}', space=sflag, size = 0x4, scoped, tag = 'scoped memory for tpu_custom_call.1']
    #allocation4 [shape = 's32[1]{0}', space=sflag, size = 0x4, scoped, tag = 'scoped memory for tpu_custom_call.1']
    #allocation5 [shape = 'u8[10240]{0}', space=vmem, size = 0x2800, scoped, tag = 'input window, operand 1, single buffered']
    #allocation6 [shape = 's32[1]{0}', space=sflag, size = 0x4, scoped, tag = 'scoped memory for tpu_custom_call.1']
    #allocation7 [shape = 'u8[53248]{0}', space=vmem, size = 0xd000, scoped, tag = 'input window, operand 3, single buffered']
    #allocation8 [shape = 'u8[53248]{0}', space=vmem, size = 0xd000, scoped, tag = 'input window, operand 5, single buffered']
    #allocation9 [shape = 's32[1]{0}', space=sflag, size = 0x4, scoped, tag = 'scoped memory for tpu_custom_call.1']
    #allocation10 [shape = 'u8[4096]{0}', space=vmem, size = 0x1000, scoped, tag = 'output window, operand 0, single buffered']
    %12 = vsyncpa [#allocation3], 0
    %13 = vsyncpa [#allocation6], 0
    %14 = vsyncpa [#allocation9], 0
    %15 = vsyncpa [#allocation4], 0
    // Predicated region
    $region2: #{tpu_custom_call.1} parent=1 // pred_check
      _
    $region3: #{tpu_custom_call.1} parent=1 // pred_check_branch
      %17 = sbr.rel (0) target = $region5
    $region4: #{tpu_custom_call.1} parent=1 // pred_region
      %s19 = ssub.s32 64, 64
      %20 = vsyncadd [#allocation3], %s19
      %s22 = sshll.u32 [#allocation2], 4
      %s23 = int_to_ptr.vmem [resolvable:$true] %s22
      %25 = dma.hbm_to_vmem [thread:$0]  %s0, 64, %s23, [#allocation3]
    $region5: #{tpu_custom_call.1} parent=1 // pred_fallthru
      _
    // Predicated region
    $region6: #{tpu_custom_call.1} parent=1 // pred_check
      _
    $region7: #{tpu_custom_call.1} parent=1 // pred_check_branch
      %27 = sbr.rel (0) target = $region9
    $region8: #{tpu_custom_call.1} parent=1 // pred_region
      %s29 = ssub.s32 320, 320
      %30 = vsyncadd [#allocation6], %s29
      %s31 = sshll.u32 [#allocation5], 4
      %s32 = int_to_ptr.vmem [resolvable:$true] %s31
      %37 = dma.hbm_to_vmem [thread:$0]  %s1, 320, %s32, [#allocation6], 64, 64, 4
    $region9: #{tpu_custom_call.1} parent=1 // pred_fallthru
      _
    // Predicated region
    $region10: #{tpu_custom_call.1} parent=1 // pred_check
      _
    $region11: #{tpu_custom_call.1} parent=1 // pred_check_branch
      %39 = sbr.rel (0) target = $region13
    $region12: #{tpu_custom_call.1} parent=1 // pred_region
      _
    $region13: #{tpu_custom_call.1} parent=1 // pred_fallthru
      _
    // Predicated region
    $region14: #{tpu_custom_call.1} parent=1 // pred_check
      _
    $region15: #{tpu_custom_call.1} parent=1 // pred_check_branch
      %41 = sbr.rel (0) target = $region17
    $region16: #{tpu_custom_call.1} parent=1 // pred_region
      %s43 = ssub.s32 1664, 1664
      %44 = vsyncadd [#allocation6], %s43
      %s45 = sshll.u32 [#allocation7], 4
      %s46 = int_to_ptr.vmem [resolvable:$true] %s45
      %51 = dma.hbm_to_vmem [thread:$0]  %s3, 1664, %s46, [#allocation6], 128, 128, 8
    $region17: #{tpu_custom_call.1} parent=1 // pred_fallthru
      _
    // Predicated region
    $region18: #{tpu_custom_call.1} parent=1 // pred_check
      _
    $region19: #{tpu_custom_call.1} parent=1 // pred_check_branch
      %53 = sbr.rel (0) target = $region21
    $region20: #{tpu_custom_call.1} parent=1 // pred_region
      _
    $region21: #{tpu_custom_call.1} parent=1 // pred_fallthru
      _
    // Predicated region
    $region22: #{tpu_custom_call.1} parent=1 // pred_check
      _
    $region23: #{tpu_custom_call.1} parent=1 // pred_check_branch
      %55 = sbr.rel (0) target = $region25
    $region24: #{tpu_custom_call.1} parent=1 // pred_region
      %s57 = ssub.s32 1664, 1664
      %58 = vsyncadd [#allocation9], %s57
      %s59 = sshll.u32 [#allocation8], 4
      %s60 = int_to_ptr.vmem [resolvable:$true] %s59
      %65 = dma.hbm_to_vmem [thread:$0]  %s5, 1664, %s60, [#allocation9], 128, 128, 8
    $region25: #{tpu_custom_call.1} parent=1 // pred_fallthru
      _
    // Predicated region
    $region26: #{tpu_custom_call.1} parent=1 // pred_check
      _
    $region27: #{tpu_custom_call.1} parent=1 // pred_check_branch
      %67 = sbr.rel (0) target = $region29
    $region28: #{tpu_custom_call.1} parent=1 // pred_region
      _
    $region29: #{tpu_custom_call.1} parent=1 // pred_fallthru
      _
    // Predicated region
    $region30: #{tpu_custom_call.1} parent=1 // pred_check
      _
    $region31: #{tpu_custom_call.1} parent=1 // pred_check_branch
      %69 = sbr.rel (0) target = $region33
    $region32: #{tpu_custom_call.1} parent=1 // pred_region
      %70 = dma.done [#allocation3], 64
    $region33: #{tpu_custom_call.1} parent=1 // pred_fallthru
      _
    // Predicated region
    $region34: #{tpu_custom_call.1} parent=1 // pred_check
      _
    $region35: #{tpu_custom_call.1} parent=1 // pred_check_branch
      %72 = sbr.rel (0) target = $region37
    $region36: #{tpu_custom_call.1} parent=1 // pred_region
      %73 = dma.done [#allocation6], 320
    $region37: #{tpu_custom_call.1} parent=1 // pred_fallthru
      _
    // Predicated region
    $region38: #{tpu_custom_call.1} parent=1 // pred_check
      _
    $region39: #{tpu_custom_call.1} parent=1 // pred_check_branch
      %75 = sbr.rel (0) target = $region41
    $region40: #{tpu_custom_call.1} parent=1 // pred_region
      %76 = dma.done [#allocation6], 1664
    $region41: #{tpu_custom_call.1} parent=1 // pred_fallthru
      _
    // Predicated region
    $region42: #{tpu_custom_call.1} parent=1 // pred_check
      _
    $region43: #{tpu_custom_call.1} parent=1 // pred_check_branch
      %78 = sbr.rel (0) target = $region45
    $region44: #{tpu_custom_call.1} parent=1 // pred_region
      %79 = dma.done [#allocation9], 1664
    $region45: #{tpu_custom_call.1} parent=1 // pred_fallthru
      _
    %v81 = vld [vmem:[#allocation2] sm:$0xf]
    %v82 = vld [vmem:[#allocation5] sm:$0xf]
    %v83 = vld [vmem:[#allocation5 + $0x4] sm:$0xf]
    %v84 = vld [vmem:[#allocation5 + $0x8] sm:$0xf]
    %v85 = vld [vmem:[#allocation5 + $0xc] sm:$0xf]
    %v86 = vld [vmem:[#allocation5 + $0x10] sm:$0x1]
    %v87 = vld [vmem:[%s2] sm:$0x1]
    %v89 = vlaneseq
    %v90 = vshrl.u32 %v89, 7
    %v91 = vsub.s32 0, %v90
    %v92 = vrot.slane %v87, %v91
    %v99 = vunpack.c.l.b16 %v82
    %v100 = vunpack.c.l.b16 %v83
    %v101 = vunpack.c.l.b16 %v84
    %v102 = vunpack.c.l.b16 %v85
    %v103 = vunpack.c.l.b16 %v86
    %v104 = vpack.c.b16 %v100, %v99
    %v105 = vpack.c.b16 %v102, %v101
    %v106 = vpack.c.b16 %v103, %v103
    %vm109 = vcmask 277504
    %v111 = vsel %vm109, %v81, 0
    %vm113 = vcmask 1040384
    %v115 = vsel %vm113, %v106, 0
    %117 = vmatprep.subr.bf16.mxu0 0
    %118 = vmatpush1.bf16.msra.mxu0 0
    %119 = vmatprep.subr.bf16.mxu0 0
    %120 = vmatpush1.bf16.msra.mxu0 0
    %121 = vmatprep.subr.bf16.mxu0 0
    %122 = vmatpush1.bf16.msra.mxu0 0
    %123 = vmatprep.subr.bf16.mxu0 0
    %124 = vmatpush1.bf16.msra.mxu0 0
    %125 = vmatprep.subr.bf16.mxu0 0
    %126 = vmatpush1.bf16.msra.mxu0 0
    %127 = vmatprep.subr.bf16.mxu0 0
    %128 = vmatpush1.bf16.msra.mxu0 %v115
    %129 = vmatprep.subr.bf16.mxu0 0
    %130 = vmatpush1.bf16.msra.mxu0 %v105
    %131 = vmatprep.subr.bf16.mxu0 0
    %132 = vmatpush1.bf16.msra.mxu0 %v104
    %133 = vmatprep.subr.bf16.mxu0 0
    %134 = vmatpush2.bf16.msra.mxu0 0
    %135 = vmatprep.subr.bf16.mxu0 0
    %136 = vmatpush2.bf16.msra.mxu0 0
    %137 = vmatprep.subr.bf16.mxu0 0
    %138 = vmatpush2.bf16.msra.mxu0 0
    %139 = vmatprep.subr.bf16.mxu0 0
    %140 = vmatpush2.bf16.msra.mxu0 0
    %141 = vmatprep.subr.bf16.mxu0 0
    %142 = vmatpush2.bf16.msra.mxu0 0
    %143 = vmatprep.subr.bf16.mxu0 0
    %144 = vmatpush2.bf16.msra.mxu0 0
    %145 = vmatprep.subr.bf16.mxu0 0
    %146 = vmatpush2.bf16.msra.mxu0 0
    %147 = vmatprep.subr.bf16.mxu0 0
    %148 = vmatpush2.bf16.msra.mxu0 0
    %149 = vmatprep.mubr.bf16.mxu0 0
    %150 = vmatmul.mubr.bf16.gmra.mxu0 %v111
    %v151 = vpop.f32.mrf.mxu0
    %v152 = vadd.f32 %v92, %v151
    %v153 = vpop.f32.mrf.mxu0
    %v154 = vpop.f32.mrf.mxu0
    %v155 = vpop.f32.mrf.mxu0
    %156 = vdwg.mxu0
    %v157 = vmax.f32 %v152, 0.0
    %v158 = vld [vmem:[#allocation7] sm:$0xff]
    %v159 = vld [vmem:[#allocation7 + $0x8] sm:$0xff]
    %v160 = vld [vmem:[#allocation7 + $0x10] sm:$0xff]
    %v161 = vld [vmem:[#allocation7 + $0x18] sm:$0xff]
    %v162 = vld [vmem:[#allocation7 + $0x20] sm:$0xff]
    %v163 = vld [vmem:[#allocation7 + $0x28] sm:$0xff]
    %v164 = vld [vmem:[#allocation7 + $0x30] sm:$0xff]
    %v165 = vld [vmem:[#allocation7 + $0x38] sm:$0xff]
    %v166 = vld [vmem:[#allocation7 + $0x40] sm:$0xff]
    %v167 = vld [vmem:[#allocation7 + $0x48] sm:$0xff]
    %v168 = vld [vmem:[#allocation7 + $0x50] sm:$0xff]
    %v169 = vld [vmem:[#allocation7 + $0x58] sm:$0xff]
    %v170 = vld [vmem:[#allocation7 + $0x60] sm:$0xf]
    %v171 = vld [vmem:[%s4] sm:$0x1]
    %v173 = vlaneseq
    %v174 = vshrl.u32 %v173, 7
    %v175 = vsub.s32 0, %v174
    %v176 = vrot.slane %v171, %v175
    %vm178 = vcmask 818176
    %v180 = vsel %vm178, %v157, 0
    %vm182 = vcmask 1043456
    %v184 = vsel %vm182, %v170, 0
    %186 = vmatprep.subr.mxu0 0.0
    %187 = vmatpush1.msra.mxu0 0.0
    %188 = vmatprep.subr.mxu0 0.0
    %189 = vmatpush1.msra.mxu0 0.0
    %190 = vmatprep.subr.mxu0 0.0
    %191 = vmatpush1.msra.mxu0 0.0
    %192 = vmatprep.subr.mxu0 0.0
    %193 = vmatpush1.msra.mxu0 %v184
    %194 = vmatprep.subr.mxu0 0.0
    %195 = vmatpush1.msra.mxu0 %v169
    %196 = vmatprep.subr.mxu0 0.0
    %197 = vmatpush1.msra.mxu0 %v168
    %198 = vmatprep.subr.mxu0 0.0
    %199 = vmatpush1.msra.mxu0 %v167
    %200 = vmatprep.subr.mxu0 0.0
    %201 = vmatpush1.msra.mxu0 %v166
    %202 = vmatprep.subr.mxu0 0.0
    %203 = vmatpush1.msra.mxu0 %v165
    %204 = vmatprep.subr.mxu0 0.0
    %205 = vmatpush1.msra.mxu0 %v164
    %206 = vmatprep.subr.mxu0 0.0
    %207 = vmatpush1.msra.mxu0 %v163
    %208 = vmatprep.subr.mxu0 0.0
    %209 = vmatpush1.msra.mxu0 %v162
    %210 = vmatprep.subr.mxu0 0.0
    %211 = vmatpush1.msra.mxu0 %v161
    %212 = vmatprep.subr.mxu0 0.0
    %213 = vmatpush1.msra.mxu0 %v160
    %214 = vmatprep.subr.mxu0 0.0
    %215 = vmatpush1.msra.mxu0 %v159
    %216 = vmatprep.subr.mxu0 0.0
    %217 = vmatpush1.msra.mxu0 %v158
    %218 = vmatprep.subr.mxu0 0.0
    %219 = vmatpush2.msra.mxu0 0.0
    %220 = vmatprep.subr.mxu0 0.0
    %221 = vmatpush2.msra.mxu0 0.0
    %222 = vmatprep.subr.mxu0 0.0
    %223 = vmatpush2.msra.mxu0 0.0
    %224 = vmatprep.subr.mxu0 0.0
    %225 = vmatpush2.msra.mxu0 0.0
    %226 = vmatprep.subr.mxu0 0.0
    %227 = vmatpush2.msra.mxu0 0.0
    %228 = vmatprep.subr.mxu0 0.0
    %229 = vmatpush2.msra.mxu0 0.0
    %230 = vmatprep.subr.mxu0 0.0
    %231 = vmatpush2.msra.mxu0 0.0
    %232 = vmatprep.subr.mxu0 0.0
    %233 = vmatpush2.msra.mxu0 0.0
    %234 = vmatprep.subr.mxu0 0.0
    %235 = vmatpush2.msra.mxu0 0.0
    %236 = vmatprep.subr.mxu0 0.0
    %237 = vmatpush2.msra.mxu0 0.0
    %238 = vmatprep.subr.mxu0 0.0
    %239 = vmatpush2.msra.mxu0 0.0
    %240 = vmatprep.subr.mxu0 0.0
    %241 = vmatpush2.msra.mxu0 0.0
    %242 = vmatprep.subr.mxu0 0.0
    %243 = vmatpush2.msra.mxu0 0.0
    %244 = vmatprep.subr.mxu0 0.0
    %245 = vmatpush2.msra.mxu0 0.0
    %246 = vmatprep.subr.mxu0 0.0
    %247 = vmatpush2.msra.mxu0 0.0
    %248 = vmatprep.subr.mxu0 0.0
    %249 = vmatpush2.msra.mxu0 0.0
    %250 = vmatprep.mubr.f32.mxu0 0.0
    %251 = vmatmul.mubr.f32.gmra.mxu0 %v180
    %v252 = vpop.f32.mrf.mxu0
    %v253 = vadd.f32 %v176, %v252
    %v254 = vpop.f32.mrf.mxu0
    %255 = vdwg.mxu0
    %v256 = vmax.f32 %v253, 0.0
    %v257 = vld [vmem:[#allocation8] sm:$0xff]
    %v258 = vld [vmem:[#allocation8 + $0x8] sm:$0xff]
    %v259 = vld [vmem:[#allocation8 + $0x10] sm:$0xff]
    %v260 = vld [vmem:[#allocation8 + $0x18] sm:$0xff]
    %v261 = vld [vmem:[#allocation8 + $0x20] sm:$0xff]
    %v262 = vld [vmem:[#allocation8 + $0x28] sm:$0xff]
    %v263 = vld [vmem:[#allocation8 + $0x30] sm:$0xff]
    %v264 = vld [vmem:[#allocation8 + $0x38] sm:$0xff]
    %v265 = vld [vmem:[#allocation8 + $0x40] sm:$0xff]
    %v266 = vld [vmem:[#allocation8 + $0x48] sm:$0xff]
    %v267 = vld [vmem:[#allocation8 + $0x50] sm:$0xff]
    %v268 = vld [vmem:[#allocation8 + $0x58] sm:$0xff]
    %v269 = vld [vmem:[#allocation8 + $0x60] sm:$0xf]
    %v270 = vld [vmem:[%s6] sm:$0x1]
    %v272 = vlaneseq
    %v273 = vshrl.u32 %v272, 7
    %v274 = vsub.s32 0, %v273
    %v275 = vrot.slane %v270, %v274
    %v278 = vsel %vm178, %v256, 0
    %v281 = vsel %vm182, %v269, 0
    %283 = vmatprep.subr.mxu0 0.0
    %284 = vmatpush1.msra.mxu0 0.0
    %285 = vmatprep.subr.mxu0 0.0
    %286 = vmatpush1.msra.mxu0 0.0
    %287 = vmatprep.subr.mxu0 0.0
    %288 = vmatpush1.msra.mxu0 0.0
    %289 = vmatprep.subr.mxu0 0.0
    %290 = vmatpush1.msra.mxu0 %v281
    %291 = vmatprep.subr.mxu0 0.0
    %292 = vmatpush1.msra.mxu0 %v268
    %293 = vmatprep.subr.mxu0 0.0
    %294 = vmatpush1.msra.mxu0 %v267
    %295 = vmatprep.subr.mxu0 0.0
    %296 = vmatpush1.msra.mxu0 %v266
    %297 = vmatprep.subr.mxu0 0.0
    %298 = vmatpush1.msra.mxu0 %v265
    %299 = vmatprep.subr.mxu0 0.0
    %300 = vmatpush1.msra.mxu0 %v264
    %301 = vmatprep.subr.mxu0 0.0
    %302 = vmatpush1.msra.mxu0 %v263
    %303 = vmatprep.subr.mxu0 0.0
    %304 = vmatpush1.msra.mxu0 %v262
    %305 = vmatprep.subr.mxu0 0.0
    %306 = vmatpush1.msra.mxu0 %v261
    %307 = vmatprep.subr.mxu0 0.0
    %308 = vmatpush1.msra.mxu0 %v260
    %309 = vmatprep.subr.mxu0 0.0
    %310 = vmatpush1.msra.mxu0 %v259
    %311 = vmatprep.subr.mxu0 0.0
    %312 = vmatpush1.msra.mxu0 %v258
    %313 = vmatprep.subr.mxu0 0.0
    %314 = vmatpush1.msra.mxu0 %v257
    %315 = vmatprep.subr.mxu0 0.0
    %316 = vmatpush2.msra.mxu0 0.0
    %317 = vmatprep.subr.mxu0 0.0
    %318 = vmatpush2.msra.mxu0 0.0
    %319 = vmatprep.subr.mxu0 0.0
    %320 = vmatpush2.msra.mxu0 0.0
    %321 = vmatprep.subr.mxu0 0.0
    %322 = vmatpush2.msra.mxu0 0.0
    %323 = vmatprep.subr.mxu0 0.0
    %324 = vmatpush2.msra.mxu0 0.0
    %325 = vmatprep.subr.mxu0 0.0
    %326 = vmatpush2.msra.mxu0 0.0
    %327 = vmatprep.subr.mxu0 0.0
    %328 = vmatpush2.msra.mxu0 0.0
    %329 = vmatprep.subr.mxu0 0.0
    %330 = vmatpush2.msra.mxu0 0.0
    %331 = vmatprep.subr.mxu0 0.0
    %332 = vmatpush2.msra.mxu0 0.0
    %333 = vmatprep.subr.mxu0 0.0
    %334 = vmatpush2.msra.mxu0 0.0
    %335 = vmatprep.subr.mxu0 0.0
    %336 = vmatpush2.msra.mxu0 0.0
    %337 = vmatprep.subr.mxu0 0.0
    %338 = vmatpush2.msra.mxu0 0.0
    %339 = vmatprep.subr.mxu0 0.0
    %340 = vmatpush2.msra.mxu0 0.0
    %341 = vmatprep.subr.mxu0 0.0
    %342 = vmatpush2.msra.mxu0 0.0
    %343 = vmatprep.subr.mxu0 0.0
    %344 = vmatpush2.msra.mxu0 0.0
    %345 = vmatprep.subr.mxu0 0.0
    %346 = vmatpush2.msra.mxu0 0.0
    %347 = vmatprep.mubr.f32.mxu0 0.0
    %348 = vmatmul.mubr.f32.gmra.mxu0 %v278
    %v349 = vpop.f32.mrf.mxu0
    %v350 = vadd.f32 %v275, %v349
    %v351 = vpop.f32.mrf.mxu0
    %352 = vdwg.mxu0
    %353 = vst [vmem:[#allocation10] sm:$0xff] %v350
    // Predicated region
    $region46: #{tpu_custom_call.1} parent=1 // pred_check
      _
    $region47: #{tpu_custom_call.1} parent=1 // pred_check_branch
      %355 = sbr.rel (0) target = $region49
    $region48: #{tpu_custom_call.1} parent=1 // pred_region
      %s357 = ssub.s32 128, 128
      %358 = vsyncadd [#allocation4], %s357
      %s360 = sshll.u32 [#allocation10], 4
      %s361 = int_to_ptr.vmem [resolvable:$true] %s360
      %363 = dma.vmem_to_hbm [thread:$0]  %s361, 128, %s7, [#allocation4]
    $region49: #{tpu_custom_call.1} parent=1 // pred_fallthru
      _
    // Predicated region
    $region50: #{tpu_custom_call.1} parent=1 // pred_check
      _
    $region51: #{tpu_custom_call.1} parent=1 // pred_check_branch
      %365 = sbr.rel (0) target = $region53
    $region52: #{tpu_custom_call.1} parent=1 // pred_region
      %366 = dma.done [#allocation4], 128
    $region53: #{tpu_custom_call.1} parent=1 // pred_fallthru
      _
    %367 = vsyncpa [#allocation3], 1
    %368 = vsyncpa [#allocation6], 1
    %369 = vsyncpa [#allocation9], 1
    %370 = vsyncpa [#allocation4], 1

</llo_original>
